<compile_context>
chip_gen: v6e
topology: v6e:2x2x1
jax: 0.10.0
libtpu: 0.0.40
codegen_flags: <defaults>
</compile_context>

<pallas_src>
import jax
import jax.numpy as jnp
from jax.experimental import pallas as pl
from jax.experimental.pallas import tpu as pltpu

HIDDEN = 128
N_ACTIONS = 4          # probs occupy lanes [0, 4); value sits in lane 4


def _round_up(n, m):
    return ((n + m - 1) // m) * m


def policy_kernel(x_ref, w1_ref, wh_ref, b_ref, out_ref):
    x = x_ref[...]                         # (TB, 8)
    b1 = b_ref[0:1, :]                     # (1, 128)  fc1 bias
    bh = b_ref[1:2, :]                     # (1, 128)  fused-head bias (zero padded)

    # fc1 + ReLU  -> hidden (TB, 128)
    h = jnp.dot(x, w1_ref[...], preferred_element_type=jnp.float32)
    h = jnp.maximum(h + b1, 0.0)

    # fused heads: one lane-dense matmul -> (TB, 128)
    head = jnp.dot(h, wh_ref[...], preferred_element_type=jnp.float32) + bh

    # softmax over the first N_ACTIONS lanes only (padded lanes masked to -inf
    # so they contribute exp(-inf) = 0 to the denominator).
    col = jax.lax.broadcasted_iota(jnp.int32, head.shape, 1)
    logits = jnp.where(col < N_ACTIONS, head, jnp.float32(-jnp.inf))
    m = jnp.max(logits, axis=-1, keepdims=True)
    e = jnp.exp(logits - m)
    probs = e / jnp.sum(e, axis=-1, keepdims=True)

    # lanes 0..3 -> action probabilities, lane 4 -> raw value head, rest 0.
    out_ref[...] = jnp.where(col < N_ACTIONS, probs,
                             jnp.where(col == N_ACTIONS, head, 0.0))


def policy_forward(x, params):
    """x: (B, 8) float32.  Returns (action_prob (B,4), state_values (B,1))."""
    B, F = x.shape
    H = HIDDEN

    # ---- pack parameters into lane-dense tensors (tiny, fused by XLA) ----
    # fused head weight: (128, 128); cols 0..3 = action head, col 4 = value
    w_heads = (jnp.zeros((H, H), jnp.float32)
               .at[:, :N_ACTIONS].set(params["wa"])
               .at[:, N_ACTIONS:N_ACTIONS + 1].set(params["wv"]))
    # packed biases: row 0 = b1, row 1 = [ba | bv | 0...]
    b_packed = (jnp.zeros((2, H), jnp.float32)
                .at[0:1, :].set(params["b1"])
                .at[1:2, :N_ACTIONS].set(params["ba"])
                .at[1, N_ACTIONS].set(params["bv"][0, 0]))

    # ---- batch tiling (degenerates to a single step for small B) ----
    TB = min(512, _round_up(B, 8))
    B_pad = _round_up(B, TB)
    if B_pad != B:
        x = jnp.pad(x, ((0, B_pad - B), (0, 0)))
    grid = (B_pad // TB,)

    out = pl.pallas_call(
        policy_kernel,
        out_shape=jax.ShapeDtypeStruct((B_pad, H), jnp.float32),
        grid=grid,
        in_specs=[
            pl.BlockSpec((TB, F), lambda i: (i, 0)),   # x: tiled over batch
            pl.BlockSpec((F, H), lambda i: (0, 0)),    # w1: resident
            pl.BlockSpec((H, H), lambda i: (0, 0)),    # fused head weight: resident
            pl.BlockSpec((2, H), lambda i: (0, 0)),    # packed biases: resident
        ],
        out_specs=pl.BlockSpec((TB, H), lambda i: (i, 0)),
        compiler_params=pltpu.CompilerParams(
            dimension_semantics=("parallel",)),
    )(x, params["w1"], w_heads, b_packed)

    probs = out[:B, :N_ACTIONS]
    values = out[:B, N_ACTIONS:N_ACTIONS + 1]
    return probs, values


def init_params(key):
    """Deterministic synthetic init matching nn.Linear shapes.

    PyTorch stores fc1.weight as (128, 8); we store the transpose (8, 128)
    so the kernel computes x @ W directly.
    """
    k1, k2, k3, k4, k5, k6 = jax.random.split(key, 6)

    def uniform(k, shape, fan_in):
        bound = 1.0 / jnp.sqrt(fan_in)
        return jax.random.uniform(k, shape, jnp.float32, -bound, bound)

    return {
        "w1": uniform(k1, (8, 128), 8.0),
        "b1": uniform(k2, (1, 128), 8.0),
        "wa": uniform(k3, (128, 4), 128.0),
        "ba": uniform(k4, (1, 4), 128.0),
        "wv": uniform(k5, (128, 1), 128.0),
        "bv": uniform(k6, (1, 1), 128.0),
    }


def policy_forward_ref(x, p):
    h = jnp.maximum(x @ p["w1"] + p["b1"], 0.0)
    logits = h @ p["wa"] + p["ba"]
    probs = jax.nn.softmax(logits, axis=-1)
    vals = h @ p["wv"] + p["bv"]
    return probs, vals


# TODO(synk): sample_action (Categorical sampling + saved_actions bookkeeping)
# is host-side RL plumbing, not part of the forward pass, so it is not
# implemented as a kernel.

if __name__ == "__main__":
    key = jax.random.PRNGKey(0)
    kx, kp = jax.random.split(key)

    B = 8  # small batch
    x = jax.random.normal(kx, (B, 8), dtype=jnp.float32)
    params = init_params(kp)

    probs, values = jax.jit(policy_forward)(x, params)
    jax.block_until_ready((probs, values))

    # sanity check against pure-JAX reference
    probs_ref, values_ref = policy_forward_ref(x, params)
    assert probs.shape == (B, 4) and values.shape == (B, 1)
    assert jnp.allclose(probs, probs_ref, atol=1e-5, rtol=1e-5)
    assert jnp.allclose(values, values_ref, atol=1e-5, rtol=1e-5)
    assert jnp.allclose(jnp.sum(probs, axis=-1), 1.0, atol=1e-5)

    print("KERNEL_OK")
</pallas_src>

<mosaic_0001>
module attributes {stable_mosaic.version = 11 : i64} {
  func.func @policy_kernel(%arg0: i32, %arg1: memref<8x8xf32, #tpu.memory_space<vmem>>, %arg2: memref<8x128xf32, #tpu.memory_space<vmem>>, %arg3: memref<128x128xf32, #tpu.memory_space<vmem>>, %arg4: memref<2x128xf32, #tpu.memory_space<vmem>>, %arg5: memref<8x128xf32, #tpu.memory_space<vmem>>) attributes {dimension_semantics = [#tpu.dimension_semantics<parallel>], iteration_bounds = array<i64: 1>, scalar_prefetch = 0 : i64, scratch_operands = 0 : i64, tpu.core_type = #tpu.core_type<tc>, window_params = [{transform_indices = @transform_0, window_bounds = array<i64: 8, 8>}, {pipeline_mode = #tpu.pipeline_mode<synchronous>, transform_indices = @transform_1, window_bounds = array<i64: 8, 128>}, {pipeline_mode = #tpu.pipeline_mode<synchronous>, transform_indices = @transform_2, window_bounds = array<i64: 128, 128>}, {pipeline_mode = #tpu.pipeline_mode<synchronous>, transform_indices = @transform_3, window_bounds = array<i64: 2, 128>}, {transform_indices = @transform_4, window_bounds = array<i64: 8, 128>}]} {
    %c0 = arith.constant 0 : index
    %c0_0 = arith.constant 0 : index
    %0 = vector.load %arg1[%c0, %c0_0] : memref<8x8xf32, #tpu.memory_space<vmem>>, vector<8x8xf32>
    %c0_1 = arith.constant 0 : index
    %c0_2 = arith.constant 0 : index
    %1 = vector.load %arg4[%c0_1, %c0_2] : memref<2x128xf32, #tpu.memory_space<vmem>>, vector<1x128xf32>
    %c1 = arith.constant 1 : index
    %c0_3 = arith.constant 0 : index
    %2 = vector.load %arg4[%c1, %c0_3] : memref<2x128xf32, #tpu.memory_space<vmem>>, vector<1x128xf32>
    %c0_4 = arith.constant 0 : index
    %c0_5 = arith.constant 0 : index
    %3 = vector.load %arg2[%c0_4, %c0_5] : memref<8x128xf32, #tpu.memory_space<vmem>>, vector<8x128xf32>
    %cst = arith.constant dense<0.000000e+00> : vector<8x128xf32>
    %4 = tpu.matmul %0, %3, %cst {dimension_numbers = #tpu.dot_dimension_numbers<[1], [0], [0], [1], [0, 0, 1, 1], [], []>} : vector<8x8xf32>, vector<8x128xf32>, vector<8x128xf32> -> vector<8x128xf32>
    %5 = vector.broadcast %1 : vector<1x128xf32> to vector<8x128xf32>
    %6 = arith.addf %4, %5 : vector<8x128xf32>
    %cst_6 = arith.constant 0.000000e+00 : f32
    %7 = vector.broadcast %cst_6 : f32 to vector<8x128xf32>
    %8 = arith.maximumf %6, %7 : vector<8x128xf32>
    %c0_7 = arith.constant 0 : index
    %c0_8 = arith.constant 0 : index
    %9 = vector.load %arg3[%c0_7, %c0_8] : memref<128x128xf32, #tpu.memory_space<vmem>>, vector<128x128xf32>
    %cst_9 = arith.constant dense<0.000000e+00> : vector<8x128xf32>
    %10 = tpu.matmul %8, %9, %cst_9 {dimension_numbers = #tpu.dot_dimension_numbers<[1], [0], [0], [1], [0, 0, 1, 1], [], []>} : vector<8x128xf32>, vector<128x128xf32>, vector<8x128xf32> -> vector<8x128xf32>
    %11 = vector.broadcast %2 : vector<1x128xf32> to vector<8x128xf32>
    %12 = arith.addf %10, %11 : vector<8x128xf32>
    %13 = tpu.iota {dimensions = array<i32: 1>} : vector<8x128xi32>
    %c4_i32 = arith.constant 4 : i32
    %14 = vector.broadcast %c4_i32 : i32 to vector<8x128xi32>
    %15 = arith.cmpi slt, %13, %14 : vector<8x128xi32>
    %cst_10 = arith.constant 0xFF800000 : f32
    %16 = vector.broadcast %cst_10 : f32 to vector<8x128xf32>
    %17 = arith.select %15, %12, %16 : vector<8x128xi1>, vector<8x128xf32>
    %cst_11 = arith.constant dense<0xFF800000> : vector<8xf32>
    %18 = vector.multi_reduction <maximumf>, %17, %cst_11 [1] : vector<8x128xf32> to vector<8xf32>
    %19 = vector.shape_cast %18 : vector<8xf32> to vector<8x1xf32>
    %20 = vector.broadcast %19 : vector<8x1xf32> to vector<8x128xf32>
    %21 = arith.subf %17, %20 : vector<8x128xf32>
    %22 = math.exp %21 : vector<8x128xf32>
    %cst_12 = arith.constant dense<0.000000e+00> : vector<8xf32>
    %23 = vector.multi_reduction <add>, %22, %cst_12 [1] : vector<8x128xf32> to vector<8xf32>
    %24 = vector.shape_cast %23 : vector<8xf32> to vector<8x1xf32>
    %25 = vector.broadcast %24 : vector<8x1xf32> to vector<8x128xf32>
    %26 = arith.divf %22, %25 : vector<8x128xf32>
    %c4_i32_13 = arith.constant 4 : i32
    %27 = vector.broadcast %c4_i32_13 : i32 to vector<8x128xi32>
    %28 = arith.cmpi slt, %13, %27 : vector<8x128xi32>
    %c4_i32_14 = arith.constant 4 : i32
    %29 = vector.broadcast %c4_i32_14 : i32 to vector<8x128xi32>
    %30 = arith.cmpi eq, %13, %29 : vector<8x128xi32>
    %cst_15 = arith.constant 0.000000e+00 : f32
    %31 = vector.broadcast %cst_15 : f32 to vector<8x128xf32>
    %32 = arith.select %30, %12, %31 : vector<8x128xi1>, vector<8x128xf32>
    %33 = arith.select %28, %26, %32 : vector<8x128xi1>, vector<8x128xf32>
    %c0_16 = arith.constant 0 : index
    %c0_17 = arith.constant 0 : index
    %34 = vector.load %arg5[%c0_16, %c0_17] : memref<8x128xf32, #tpu.memory_space<vmem>>, vector<8x128xf32>
    tpu.vector_store %arg5[%c0_16, %c0_17], %33 {strides = array<i32>} : memref<8x128xf32, #tpu.memory_space<vmem>>, vector<8x128xf32>,
    return
  }
  func.func @transform_0(%arg0: i32) -> (i32, i32) {
    %c0_i32 = arith.constant 0 : i32
    %c0_i32_0 = arith.constant 0 : i32
    return %arg0, %c0_i32 : i32, i32
  }
  func.func @transform_1(%arg0: i32) -> (i32, i32) {
    %c0_i32 = arith.constant 0 : i32
    %c0_i32_0 = arith.constant 0 : i32
    %c0_i32_1 = arith.constant 0 : i32
    return %c0_i32, %c0_i32_0 : i32, i32
  }
  func.func @transform_2(%arg0: i32) -> (i32, i32) {
    %c0_i32 = arith.constant 0 : i32
    %c0_i32_0 = arith.constant 0 : i32
    %c0_i32_1 = arith.constant 0 : i32
    return %c0_i32, %c0_i32_0 : i32, i32
  }
  func.func @transform_3(%arg0: i32) -> (i32, i32) {
    %c0_i32 = arith.constant 0 : i32
    %c0_i32_0 = arith.constant 0 : i32
    %c0_i32_1 = arith.constant 0 : i32
    return %c0_i32, %c0_i32_0 : i32, i32
  }
  func.func @transform_4(%arg0: i32) -> (i32, i32) {
    %c0_i32 = arith.constant 0 : i32
    %c0_i32_0 = arith.constant 0 : i32
    return %arg0, %c0_i32 : i32, i32
  }
}

</mosaic_0001>

<llo_original>
// kernel: policy_forward.1
$region0: #{policy_forward.1}
  #allocation0 [shape = 'u32[]', space=smem, size = 0x4, offset = 0x4, fixed_abs, tag = 'smem constant byte address 0x4 - core index']
  #allocation1 [shape = 'u32[144,128]{1,0:T(1,128)}', space=vmem, size = 0x12000, scoped, tag = 'internal scratch']
  %s0 = inlined_call_operand.vmem [shape: f32[8,8], index: 0, kind: input, shape index: {}]
  %s1 = inlined_call_operand.vmem [shape: f32[8,128], index: 1, kind: input, shape index: {}]
  %s2 = inlined_call_operand.vmem [shape: f32[128,128], index: 2, kind: input, shape index: {}]
  %s3 = inlined_call_operand.vmem [shape: f32[2,128], index: 3, kind: input, shape index: {}]
  %s4 = inlined_call_operand.vmem [shape: f32[8,128], index: 4, kind: output, shape index: {}]
  %s5 = sld [smem:[#allocation0]]
  $region26: #{policy_forward.1} parent=0
    _
  %s7 = ssub.s32 1, %s5
  %s8 = scalar_select 0, %s7, %s5
  // Predicated region
  $region2: #{policy_forward.1} parent=0 // pred_check
    _
  $region3: #{policy_forward.1} parent=0 // pred_check_branch
    %10 = sbr.rel (0) target = $region5
  $region4: #{policy_forward.1} parent=0 // pred_region
    _
  $region5: #{policy_forward.1} parent=0 // pred_fallthru
    _
  // Predicated region
  $region6: #{policy_forward.1} parent=0 // pred_check
    _
  $region7: #{policy_forward.1} parent=0 // pred_check_branch
    %12 = sbr.rel (0) target = $region9
  $region8: #{policy_forward.1} parent=0 // pred_region
    _
  $region9: #{policy_forward.1} parent=0 // pred_fallthru
    _
  // Predicated region
  $region10: #{policy_forward.1} parent=0 // pred_check
    _
  $region11: #{policy_forward.1} parent=0 // pred_check_branch
    %14 = sbr.rel (0) target = $region13
  $region12: #{policy_forward.1} parent=0 // pred_region
    _
  $region13: #{policy_forward.1} parent=0 // pred_fallthru
    _
  // Predicated region
  $region14: #{policy_forward.1} parent=0 // pred_check
    _
  $region15: #{policy_forward.1} parent=0 // pred_check_branch
    %16 = sbr.rel (0) target = $region17
  $region16: #{policy_forward.1} parent=0 // pred_region
    _
  $region17: #{policy_forward.1} parent=0 // pred_fallthru
    _
  %v17 = vld [vmem:[%s0] sm:$0xff]
  %v18 = vld [vmem:[%s3] sm:$0x1]
  %v19 = vld [vmem:[%s3 + $0x1] sm:$0x1]
  %v20 = vld [vmem:[%s1] sm:$0xff]
  %v21 = vlaneseq
  %v22 = vshrl.u32 %v21, 7
  %v23 = vsub.s32 0, %v22
  %v24 = vrot.slane %v18, %v23
  %vm25 = vcmask 64512
  %v27 = vsel %vm25, %v17, 0
  %29 = vmatprep.subr.mxu0 0.0
  %30 = vmatpush1.msra.mxu0 0.0
  %31 = vmatprep.subr.mxu0 0.0
  %32 = vmatpush1.msra.mxu0 0.0
  %33 = vmatprep.subr.mxu0 0.0
  %34 = vmatpush1.msra.mxu0 0.0
  %35 = vmatprep.subr.mxu0 0.0
  %36 = vmatpush1.msra.mxu0 0.0
  %37 = vmatprep.subr.mxu0 0.0
  %38 = vmatpush1.msra.mxu0 0.0
  %39 = vmatprep.subr.mxu0 0.0
  %40 = vmatpush1.msra.mxu0 0.0
  %41 = vmatprep.subr.mxu0 0.0
  %42 = vmatpush1.msra.mxu0 0.0
  %43 = vmatprep.subr.mxu0 0.0
  %44 = vmatpush1.msra.mxu0 0.0
  %45 = vmatprep.subr.mxu0 0.0
  %46 = vmatpush1.msra.mxu0 0.0
  %47 = vmatprep.subr.mxu0 0.0
  %48 = vmatpush1.msra.mxu0 0.0
  %49 = vmatprep.subr.mxu0 0.0
  %50 = vmatpush1.msra.mxu0 0.0
  %51 = vmatprep.subr.mxu0 0.0
  %52 = vmatpush1.msra.mxu0 0.0
  %53 = vmatprep.subr.mxu0 0.0
  %54 = vmatpush1.msra.mxu0 0.0
  %55 = vmatprep.subr.mxu0 0.0
  %56 = vmatpush1.msra.mxu0 0.0
  %57 = vmatprep.subr.mxu0 0.0
  %58 = vmatpush1.msra.mxu0 0.0
  %59 = vmatprep.subr.mxu0 0.0
  %60 = vmatpush1.msra.mxu0 %v20
  %61 = vmatprep.subr.mxu0 0.0
  %62 = vmatpush2.msra.mxu0 0.0
  %63 = vmatprep.subr.mxu0 0.0
  %64 = vmatpush2.msra.mxu0 0.0
  %65 = vmatprep.subr.mxu0 0.0
  %66 = vmatpush2.msra.mxu0 0.0
  %67 = vmatprep.subr.mxu0 0.0
  %68 = vmatpush2.msra.mxu0 0.0
  %69 = vmatprep.subr.mxu0 0.0
  %70 = vmatpush2.msra.mxu0 0.0
  %71 = vmatprep.subr.mxu0 0.0
  %72 = vmatpush2.msra.mxu0 0.0
  %73 = vmatprep.subr.mxu0 0.0
  %74 = vmatpush2.msra.mxu0 0.0
  %75 = vmatprep.subr.mxu0 0.0
  %76 = vmatpush2.msra.mxu0 0.0
  %77 = vmatprep.subr.mxu0 0.0
  %78 = vmatpush2.msra.mxu0 0.0
  %79 = vmatprep.subr.mxu0 0.0
  %80 = vmatpush2.msra.mxu0 0.0
  %81 = vmatprep.subr.mxu0 0.0
  %82 = vmatpush2.msra.mxu0 0.0
  %83 = vmatprep.subr.mxu0 0.0
  %84 = vmatpush2.msra.mxu0 0.0
  %85 = vmatprep.subr.mxu0 0.0
  %86 = vmatpush2.msra.mxu0 0.0
  %87 = vmatprep.subr.mxu0 0.0
  %88 = vmatpush2.msra.mxu0 0.0
  %89 = vmatprep.subr.mxu0 0.0
  %90 = vmatpush2.msra.mxu0 0.0
  %91 = vmatprep.subr.mxu0 0.0
  %92 = vmatpush2.msra.mxu0 0.0
  %93 = vmatprep.mubr.f32.mxu0 0.0
  %94 = vmatmul.mubr.f32.gmra.mxu0 %v27
  %v95 = vpop.f32.mrf.mxu0
  %v96 = vadd.f32 %v24, %v95
  %v97 = vpop.f32.mrf.mxu0
  %98 = vdwg.mxu0
  %v99 = vmax.f32 %v96, 0.0
  %v100 = vld [vmem:[%s2] sm:$0xff]
  %v101 = vld [vmem:[%s2 + $0x8] sm:$0xff]
  %v102 = vld [vmem:[%s2 + $0x10] sm:$0xff]
  %v103 = vld [vmem:[%s2 + $0x18] sm:$0xff]
  %v104 = vld [vmem:[%s2 + $0x20] sm:$0xff]
  %v105 = vld [vmem:[%s2 + $0x28] sm:$0xff]
  %v106 = vld [vmem:[%s2 + $0x30] sm:$0xff]
  %v107 = vld [vmem:[%s2 + $0x38] sm:$0xff]
  %v108 = vld [vmem:[%s2 + $0x40] sm:$0xff]
  %v109 = vld [vmem:[%s2 + $0x48] sm:$0xff]
  %v110 = vld [vmem:[%s2 + $0x50] sm:$0xff]
  %v111 = vld [vmem:[%s2 + $0x58] sm:$0xff]
  %v112 = vld [vmem:[%s2 + $0x60] sm:$0xff]
  %v113 = vld [vmem:[%s2 + $0x68] sm:$0xff]
  %v114 = vld [vmem:[%s2 + $0x70] sm:$0xff]
  %v115 = vld [vmem:[%s2 + $0x78] sm:$0xff]
  %v116 = vlaneseq
  %v117 = vshrl.u32 %v116, 7
  %v118 = vsub.s32 0, %v117
  %v119 = vrot.slane %v19, %v118
  %120 = vmatprep.subr.mxu0 0.0
  %121 = vmatpush1.msra.mxu0 %v115
  %122 = vmatprep.subr.mxu0 0.0
  %123 = vmatpush1.msra.mxu0 %v114
  %124 = vmatprep.subr.mxu0 0.0
  %125 = vmatpush1.msra.mxu0 %v113
  %126 = vmatprep.subr.mxu0 0.0
  %127 = vmatpush1.msra.mxu0 %v112
  %128 = vmatprep.subr.mxu0 0.0
  %129 = vmatpush1.msra.mxu0 %v111
  %130 = vmatprep.subr.mxu0 0.0
  %131 = vmatpush1.msra.mxu0 %v110
  %132 = vmatprep.subr.mxu0 0.0
  %133 = vmatpush1.msra.mxu0 %v109
  %134 = vmatprep.subr.mxu0 0.0
  %135 = vmatpush1.msra.mxu0 %v108
  %136 = vmatprep.subr.mxu0 0.0
  %137 = vmatpush1.msra.mxu0 %v107
  %138 = vmatprep.subr.mxu0 0.0
  %139 = vmatpush1.msra.mxu0 %v106
  %140 = vmatprep.subr.mxu0 0.0
  %141 = vmatpush1.msra.mxu0 %v105
  %142 = vmatprep.subr.mxu0 0.0
  %143 = vmatpush1.msra.mxu0 %v104
  %144 = vmatprep.subr.mxu0 0.0
  %145 = vmatpush1.msra.mxu0 %v103
  %146 = vmatprep.subr.mxu0 0.0
  %147 = vmatpush1.msra.mxu0 %v102
  %148 = vmatprep.subr.mxu0 0.0
  %149 = vmatpush1.msra.mxu0 %v101
  %150 = vmatprep.subr.mxu0 0.0
  %151 = vmatpush1.msra.mxu0 %v100
  %152 = vmatprep.subr.mxu0 0.0
  %153 = vmatpush2.msra.mxu0 0.0
  %154 = vmatprep.subr.mxu0 0.0
  %155 = vmatpush2.msra.mxu0 0.0
  %156 = vmatprep.subr.mxu0 0.0
  %157 = vmatpush2.msra.mxu0 0.0
  %158 = vmatprep.subr.mxu0 0.0
  %159 = vmatpush2.msra.mxu0 0.0
  %160 = vmatprep.subr.mxu0 0.0
  %161 = vmatpush2.msra.mxu0 0.0
  %162 = vmatprep.subr.mxu0 0.0
  %163 = vmatpush2.msra.mxu0 0.0
  %164 = vmatprep.subr.mxu0 0.0
  %165 = vmatpush2.msra.mxu0 0.0
  %166 = vmatprep.subr.mxu0 0.0
  %167 = vmatpush2.msra.mxu0 0.0
  %168 = vmatprep.subr.mxu0 0.0
  %169 = vmatpush2.msra.mxu0 0.0
  %170 = vmatprep.subr.mxu0 0.0
  %171 = vmatpush2.msra.mxu0 0.0
  %172 = vmatprep.subr.mxu0 0.0
  %173 = vmatpush2.msra.mxu0 0.0
  %174 = vmatprep.subr.mxu0 0.0
  %175 = vmatpush2.msra.mxu0 0.0
  %176 = vmatprep.subr.mxu0 0.0
  %177 = vmatpush2.msra.mxu0 0.0
  %178 = vmatprep.subr.mxu0 0.0
  %179 = vmatpush2.msra.mxu0 0.0
  %180 = vmatprep.subr.mxu0 0.0
  %181 = vmatpush2.msra.mxu0 0.0
  %182 = vmatprep.subr.mxu0 0.0
  %183 = vmatpush2.msra.mxu0 0.0
  %184 = vmatprep.mubr.f32.mxu0 0.0
  %185 = vmatmul.mubr.f32.gmra.mxu0 %v99
  %v186 = vpop.f32.mrf.mxu0
  %v187 = vadd.f32 %v119, %v186
  %v188 = vpop.f32.mrf.mxu0
  %189 = vdwg.mxu0
  %v190 = vlaneseq
  %v191 = vand.u32 %v190, 127
  %vm192 = vcmp.lt.s32.totalorder %v191, 4
  %v193 = vsel %vm192, %v187, -inf
  %194 = vmax.xlane.f32.xlu0 %v193
  %v195 = vpop.xlane.xlu0 %194
  %v196 = vsub.f32 %v193, %v195
  %v197 = vmul.f32 %v196, 1.442695
  %v198 = vpow.pop %v197
  %199 = vadd.xlane.f32.xlu0 %v198
  %v200 = vpop.xlane.xlu0 %199
  %v201 = vrcp.pop %v200
  %v202 = vmul.f32 %v198, %v201
  %vm203 = vcmp.eq.s32.totalorder %v191, 4
  %v204 = vsel %vm203, %v187, 0.0
  %v205 = vsel %vm192, %v202, %v204
  %206 = vst [vmem:[%s4] sm:$0xff] %v205
  // Predicated region
  $region18: #{policy_forward.1} parent=0 // pred_check
    _
  $region19: #{policy_forward.1} parent=0 // pred_check_branch
    %208 = sbr.rel (0) target = $region21
  $region20: #{policy_forward.1} parent=0 // pred_region
    _
  $region21: #{policy_forward.1} parent=0 // pred_fallthru
    _
  // Predicated region
  $region22: #{policy_forward.1} parent=0 // pred_check
    _
  $region23: #{policy_forward.1} parent=0 // pred_check_branch
    %210 = sbr.rel (0) target = $region25
  $region24: #{policy_forward.1} parent=0 // pred_region
    _
  $region25: #{policy_forward.1} parent=0 // pred_fallthru
    _

</llo_original>
